<compile_context>
chip_gen: v6e
topology: v6e:2x2x1
jax: 0.10.0
libtpu: 0.0.40
codegen_flags: <defaults>
</compile_context>

<pallas_src>
import functools

import jax
import jax.numpy as jnp
from jax import lax
from jax.experimental import pallas as pl
from jax.experimental.pallas import tpu as pltpu


def _biattention_kernel(x_ref, mem_ref, idot_ref, mdotb_ref, rowmask_ref,
                        scale_ref, out_ref, out2_ref, acc_sc, m_sc, l_sc,
                        *, mxu_bf16):
    qi = pl.program_id(1)
    nq = pl.num_programs(1)
    d = x_ref.shape[2]

    x = x_ref[0]                        # (TQ, D) f32 — current query tile
    mem = mem_ref[0]                    # (L,  D) f32 (or bf16, pre-cast once in wrapper)
    input_dot = idot_ref[0]             # (TQ, 1) f32 — hoisted x @ w_input
    mdot_b = mdotb_ref[0]               # (1,  L) f32 — hoisted w_mem·mem^T + (-1e20)*col_mask
    row_masked = rowmask_ref[0] > 0.5   # (TQ, 1) bool, True == masked
    scale = scale_ref[...]              # (1,  D) f32
    neg_big = jnp.float32(-1e20)
    op_dtype = mem.dtype                # bf16 on the fast MXU path, else f32

    # Cross scores: contract the shared D (A @ B^T, MXU-native layout — no in-kernel
    # transpose of the resident (L, D) memory block).
    a_op = (x * scale).astype(op_dtype)
    cross = lax.dot_general(a_op, mem, (((1,), (1,)), ((), ())),
                            preferred_element_type=jnp.float32)            # (TQ, L)

    # Column mask arrives additively inside mdot_b (free on the existing broadcast add);
    # a single (TQ, L) select applies the row mask and keeps exact torch masked_fill
    # semantics (fully-masked rows -> uniform softmax -> mean(memory)).
    att = cross + input_dot + mdot_b                                        # (TQ, L)
    att = jnp.where(row_masked, neg_big, att)

    # Softmax over memory positions with deferred normalization.
    att_max = jnp.max(att, axis=-1, keepdims=True)                          # (TQ, 1)
    e1 = jnp.exp(att - att_max)                                             # (TQ, L)
    denom = jnp.sum(e1, axis=-1, keepdims=True)                             # (TQ, 1)
    num1 = lax.dot_general(e1.astype(op_dtype), mem, (((1,), (0,)), ((), ())),
                           preferred_element_type=jnp.float32)              # (TQ, D)
    if mxu_bf16:
        inv = pl.reciprocal(denom, approx=True)
    else:
        inv = 1.0 / denom
    out1 = num1 * inv                                                       # (TQ, D)

    # Per-tile output segments via lane-slice stores (keep D % 128 == 0 in production so
    # these are unmasked vst).  Segment 3 (out2*out1) is finished in the wrapper once out2
    # is known; its lanes are left untouched here.
    out_ref[0, :, 0:d] = x
    out_ref[0, :, d:2 * d] = out1
    out_ref[0, :, 2 * d:3 * d] = x * out1

    # out2 path: online softmax over the per-row maxima, accumulated across q-tiles in
    # tiny VMEM scratch, finalized on the last tile into the second (B, 1, D) output.
    @pl.when(qi == 0)
    def _init():
        m_sc[...] = jnp.full_like(m_sc, -jnp.inf)
        l_sc[...] = jnp.zeros_like(l_sc)
        acc_sc[...] = jnp.zeros_like(acc_sc)

    t_max = jnp.max(att_max, axis=0, keepdims=True)                         # (1, 1)
    m_prev = m_sc[...]
    m_new = jnp.maximum(m_prev, t_max)
    corr = jnp.exp(m_prev - m_new)                                          # (1, 1)
    e2 = jnp.exp(att_max - m_new)                                           # (TQ, 1)
    l_sc[...] = corr * l_sc[...] + jnp.sum(e2, axis=0, keepdims=True)
    # skinny matmul (contract the row axis) instead of broadcast-multiply + sublane reduce
    part = lax.dot_general(e2, x, (((0,), (0,)), ((), ())),
                           preferred_element_type=jnp.float32)              # (1, D)
    acc_sc[...] = corr * acc_sc[...] + part
    m_sc[...] = m_new

    @pl.when(qi == nq - 1)
    def _finalize():
        out2_ref[0] = acc_sc[...] / l_sc[...]                               # (1, D)


def _round_up(x, m):
    return ((x + m - 1) // m) * m


def _choose_q_tile(length, target=256):
    """Return (L_padded, TQ) with TQ % 8 == 0 and TQ | L_padded.

    Prefers a divisor of L (no padding); otherwise pads L so a lane/MXU-friendly tile is
    used instead of falling back to one giant (L, L) tile.  target=256 keeps the MXU
    fully occupied on v6e/v7x; 128 already suffices on v5e.
    """
    if length <= target:
        lp = _round_up(length, 8)
        return lp, lp
    for tq in range(target, 7, -1):
        if tq % 8 == 0 and length % tq == 0:
            return length, tq
    tq = max(8, _round_up(target, 8))
    return _round_up(length, tq), tq


def biattention(x, mem, mask, w_input, w_memory, dot_scale, *, mxu_bf16=False,
                q_tile=None):
    """BiAttention forward.

    x, mem: (B, L, D) f32; mask: (B, 1, L) f32 with 1.0 == masked;
    w_input, w_memory: (D, 1) f32 (transposed nn.Linear(D, 1) weights);
    dot_scale: (1, D) f32. Returns (B, L, 4*D) f32.

    mxu_bf16=True runs both large matmuls with bf16 operands / f32 accumulation; it pays
    off on every generation (v5e's MXU is bf16-native too).  Default is False only to
    keep bit-accurate f32 numerics.  For v7x megacore, keep B per chip >= 2 (B is the
    only "parallel" grid axis).
    """
    B, L, D = x.shape
    if q_tile is not None:
        TQ = int(q_tile)
        assert TQ % 8 == 0, "q_tile must be a multiple of 8"
        Lp = _round_up(L, TQ)
    else:
        Lp, TQ = _choose_q_tile(L)
    NQ = Lp // TQ

    neg_big = jnp.float32(-1e20)
    if Lp != L:
        # Pad rows/cols; padded positions are marked masked so they never contribute.
        # (Degenerate caveat: a *fully masked real row* then averages memory over Lp
        #  instead of L — that row's output is meaningless in the reference too.)
        pad = Lp - L
        x = jnp.pad(x, ((0, 0), (0, pad), (0, 0)))
        mem = jnp.pad(mem, ((0, 0), (0, pad), (0, 0)))
        mask = jnp.pad(mask, ((0, 0), (0, 0), (0, pad)), constant_values=1.0)

    # Loop-invariant work hoisted out of the kernel (done once per batch by XLA, not once
    # per q-tile): rank-1 projections, column-mask bias, and the bf16 cast of memory.
    input_dot = x @ w_input                                             # (B, Lp, 1)
    mdot_biased = jnp.swapaxes(mem @ w_memory, 1, 2) + neg_big * mask   # (B, 1, Lp)
    row_mask = jnp.swapaxes(mask, 1, 2)                                 # (B, Lp, 1)
    mem_op = mem.astype(jnp.bfloat16) if mxu_bf16 else mem              # cast once

    # Generation-aware VMEM budget: double-buffered inputs/outputs, small scratch, and
    # the (TQ, L) temporaries (cross/att/e1/bf16 copies) Mosaic keeps in VMEM.
    f32 = 4
    esz = 2 if mxu_bf16 else 4
    est = (2 * (TQ * D * f32 + Lp * D * esz + TQ * f32 + Lp * f32 + TQ * f32 + D * f32)
           + 2 * (TQ * 4 * D * f32 + D * f32)
           + 5 * TQ * Lp * f32
           + (D + 2) * f32
           + (2 << 20))
    try:
        cap = getattr(pltpu.get_tpu_info(), "vmem_capacity_bytes", None) or (64 << 20)
    except Exception:
        cap = 64 << 20
    vmem_limit = int(min(max(est, 16 << 20), int(cap * 0.85)))

    kernel = functools.partial(_biattention_kernel, mxu_bf16=mxu_bf16)
    y, out2 = pl.pallas_call(
        kernel,
        out_shape=(jax.ShapeDtypeStruct((B, Lp, 4 * D), jnp.float32),
                   jax.ShapeDtypeStruct((B, 1, D), jnp.float32)),
        grid_spec=pltpu.PrefetchScalarGridSpec(
            num_scalar_prefetch=0,
            grid=(B, NQ),
            in_specs=[
                pl.BlockSpec((1, TQ, D), lambda b, q: (b, q, 0)),    # x tile
                # Memory block index is constant across q (resident per batch, no re-DMA).
                # If VMEM is still tight on v7x, add pipeline_mode=pl.Buffered(1) here.
                pl.BlockSpec((1, Lp, D), lambda b, q: (b, 0, 0)),
                pl.BlockSpec((1, TQ, 1), lambda b, q: (b, q, 0)),    # hoisted input_dot tile
                pl.BlockSpec((1, 1, Lp), lambda b, q: (b, 0, 0)),    # memory_dot + col-mask bias
                pl.BlockSpec((1, TQ, 1), lambda b, q: (b, q, 0)),    # row mask tile
                pl.BlockSpec((1, D), lambda b, q: (0, 0)),           # dot_scale
            ],
            out_specs=[
                # Output tiled along q: no (1, L, 4D) VMEM-resident block (v7x fits),
                # per-tile writebacks pipeline naturally.
                pl.BlockSpec((1, TQ, 4 * D), lambda b, q: (b, q, 0)),
                pl.BlockSpec((1, 1, D), lambda b, q: (b, 0, 0)),     # out2 (written last tile)
            ],
            scratch_shapes=[
                pltpu.VMEM((1, D), jnp.float32),   # out2 numerator accumulator
                pltpu.VMEM((1, 1), jnp.float32),   # running max of row maxima
                pltpu.VMEM((1, 1), jnp.float32),   # running denominator
            ],
        ),
        compiler_params=pltpu.CompilerParams(
            dimension_semantics=("parallel", "arbitrary"),
            vmem_limit_bytes=vmem_limit,
        ),
    )(x, mem_op, input_dot, mdot_biased, row_mask, dot_scale)

    # Finish segment 3 (out2 * out1) outside the kernel; XLA fuses this into a single
    # read-of-seg1 / write-of-seg3 pass.  This is what lets the kernel output be tiled
    # along q instead of kept VMEM-resident per batch.
    y = y.at[:, :, 3 * D:].set(y[:, :, D:2 * D] * out2)
    if Lp != L:
        y = y[:, :L, :]
    return y


def biattention_ref(x, mem, mask, w_input, w_memory, dot_scale):
    """Pure-JAX reference mirroring the torch forward."""
    input_dot = x @ w_input                                  # (B, L, 1)
    memory_dot = jnp.transpose(mem @ w_memory, (0, 2, 1))    # (B, 1, L)
    cross = jnp.einsum("bld,bmd->blm", x * dot_scale[0], mem)
    att = input_dot + memory_dot + cross
    mb = mask[:, 0, :] > 0.5                                 # (B, L)
    att = jnp.where(mb[:, :, None], -1e20, att)
    att = jnp.where(mb[:, None, :], -1e20, att)
    w1 = jax.nn.softmax(att, axis=-1)
    o1 = jnp.einsum("blm,bmd->bld", w1, mem)
    w2 = jax.nn.softmax(jnp.max(att, axis=-1), axis=-1)[:, None, :]
    o2 = jnp.einsum("blm,bmd->bld", w2, x)                   # (B, 1, D)
    return jnp.concatenate([x, o1, x * o1, o2 * o1], axis=-1)


if __name__ == "__main__":
    keys = jax.random.split(jax.random.PRNGKey(0), 16)

    # ---- config 1: small shapes, single q-tile (NQ = 1) ----
    B, L, D = 2, 8, 32
    x = jax.random.normal(keys[0], (B, L, D), dtype=jnp.float32)
    mem = jax.random.normal(keys[1], (B, L, D), dtype=jnp.float32)
    bound = 1.0 / (D ** 0.5)
    w_input = jax.random.uniform(keys[2], (D, 1), minval=-bound, maxval=bound, dtype=jnp.float32)
    w_memory = jax.random.uniform(keys[3], (D, 1), minval=-bound, maxval=bound, dtype=jnp.float32)
    dot_scale = jax.random.uniform(keys[4], (1, D), minval=bound, maxval=1.0, dtype=jnp.float32)
    mask = jnp.zeros((B, 1, L), dtype=jnp.float32)
    mask = mask.at[0, 0, L - 2:].set(1.0)
    mask = mask.at[1, 0, L - 1:].set(1.0)

    ref = biattention_ref(x, mem, mask, w_input, w_memory, dot_scale)
    out = jax.block_until_ready(biattention(x, mem, mask, w_input, w_memory, dot_scale))
    assert out.shape == (B, L, 4 * D)
    assert jnp.allclose(out, ref, atol=1e-4, rtol=1e-4), "f32 kernel mismatch vs JAX reference"

    # bf16-operand / f32-accumulate MXU path (worth enabling on v5e/v6e/v7x) — looser tol.
    out_fast = jax.block_until_ready(
        biattention(x, mem, mask, w_input, w_memory, dot_scale, mxu_bf16=True))
    assert jnp.allclose(out_fast, ref, atol=5e-2, rtol=5e-2), "bf16 kernel mismatch vs reference"

    # ---- config 2: exercises the q-tile grid axis (NQ = 2), tiled output writeback,
    #      and the online out2 accumulation ----
    B2, L2, D2 = 2, 16, 32
    x2 = jax.random.normal(keys[5], (B2, L2, D2), dtype=jnp.float32)
    mem2 = jax.random.normal(keys[6], (B2, L2, D2), dtype=jnp.float32)
    b2 = 1.0 / (D2 ** 0.5)
    w_in2 = jax.random.uniform(keys[7], (D2, 1), minval=-b2, maxval=b2, dtype=jnp.float32)
    w_mem2 = jax.random.uniform(keys[8], (D2, 1), minval=-b2, maxval=b2, dtype=jnp.float32)
    scale2 = jax.random.uniform(keys[9], (1, D2), minval=b2, maxval=1.0, dtype=jnp.float32)
    mask2 = jnp.zeros((B2, 1, L2), dtype=jnp.float32)
    mask2 = mask2.at[0, 0, L2 - 3:].set(1.0)

    ref2 = biattention_ref(x2, mem2, mask2, w_in2, w_mem2, scale2)
    out_tiled = jax.block_until_ready(
        biattention(x2, mem2, mask2, w_in2, w_mem2, scale2, q_tile=8))
    assert jnp.allclose(out_tiled, ref2, atol=1e-4, rtol=1e-4), "tiled kernel mismatch vs reference"

    # ---- config 3: awkward L that triggers the padding path (L=12 -> 16, TQ=8) ----
    B3, L3, D3 = 2, 12, 32
    x3 = jax.random.normal(keys[10], (B3, L3, D3), dtype=jnp.float32)
    mem3 = jax.random.normal(keys[11], (B3, L3, D3), dtype=jnp.float32)
    b3 = 1.0 / (D3 ** 0.5)
    w_in3 = jax.random.uniform(keys[12], (D3, 1), minval=-b3, maxval=b3, dtype=jnp.float32)
    w_mem3 = jax.random.uniform(keys[13], (D3, 1), minval=-b3, maxval=b3, dtype=jnp.float32)
    scale3 = jax.random.uniform(keys[14], (1, D3), minval=b3, maxval=1.0, dtype=jnp.float32)
    mask3 = jnp.zeros((B3, 1, L3), dtype=jnp.float32)   # no masked rows (see padding caveat)

    ref3 = biattention_ref(x3, mem3, mask3, w_in3, w_mem3, scale3)
    out3 = jax.block_until_ready(
        biattention(x3, mem3, mask3, w_in3, w_mem3, scale3, q_tile=8))
    assert out3.shape == (B3, L3, 4 * D3)
    assert jnp.allclose(out3, ref3, atol=1e-4, rtol=1e-4), "padded kernel mismatch vs reference"

    print("KERNEL_OK")
</pallas_src>

<mosaic_0001>
module attributes {stable_mosaic.version = 11 : i64} {
  func.func @_biattention_kernel(%arg0: i32, %arg1: i32, %arg2: memref<1x8x32xf32, #tpu.memory_space<vmem>>, %arg3: memref<1x8x32xf32, #tpu.memory_space<vmem>>, %arg4: memref<1x8x1xf32, #tpu.memory_space<vmem>>, %arg5: memref<1x1x8xf32, #tpu.memory_space<vmem>>, %arg6: memref<1x8x1xf32, #tpu.memory_space<vmem>>, %arg7: memref<1x32xf32, #tpu.memory_space<vmem>>, %arg8: memref<1x8x128xf32, #tpu.memory_space<vmem>>, %arg9: memref<1x1x32xf32, #tpu.memory_space<vmem>>, %arg10: memref<1x32xf32, #tpu.memory_space<vmem>>, %arg11: memref<1x1xf32, #tpu.memory_space<vmem>>, %arg12: memref<1x1xf32, #tpu.memory_space<vmem>>) attributes {dimension_semantics = [#tpu.dimension_semantics<parallel>, #tpu.dimension_semantics<arbitrary>], iteration_bounds = array<i64: 2, 1>, scalar_prefetch = 0 : i64, scratch_operands = 3 : i64, tpu.core_type = #tpu.core_type<tc>, window_params = [{transform_indices = @transform_0, window_bounds = array<i64: 1, 8, 32>}, {transform_indices = @transform_1, window_bounds = array<i64: 1, 8, 32>}, {transform_indices = @transform_2, window_bounds = array<i64: 1, 8, 1>}, {transform_indices = @transform_3, window_bounds = array<i64: 1, 1, 8>}, {transform_indices = @transform_4, window_bounds = array<i64: 1, 8, 1>}, {pipeline_mode = #tpu.pipeline_mode<synchronous>, transform_indices = @transform_5, window_bounds = array<i64: 1, 32>}, {transform_indices = @transform_6, window_bounds = array<i64: 1, 8, 128>}, {transform_indices = @transform_7, window_bounds = array<i64: 1, 1, 32>}]} {
    %c0 = arith.constant 0 : index
    %c0_0 = arith.constant 0 : index
    %c0_1 = arith.constant 0 : index
    %0 = vector.load %arg2[%c0, %c0_0, %c0_1] : memref<1x8x32xf32, #tpu.memory_space<vmem>>, vector<1x8x32xf32>
    %1 = vector.shape_cast %0 : vector<1x8x32xf32> to vector<8x32xf32>
    %c0_2 = arith.constant 0 : index
    %c0_3 = arith.constant 0 : index
    %c0_4 = arith.constant 0 : index
    %2 = vector.load %arg3[%c0_2, %c0_3, %c0_4] : memref<1x8x32xf32, #tpu.memory_space<vmem>>, vector<1x8x32xf32>
    %3 = vector.shape_cast %2 : vector<1x8x32xf32> to vector<8x32xf32>
    %c0_5 = arith.constant 0 : index
    %c0_6 = arith.constant 0 : index
    %c0_7 = arith.constant 0 : index
    %4 = vector.load %arg4[%c0_5, %c0_6, %c0_7] : memref<1x8x1xf32, #tpu.memory_space<vmem>>, vector<1x8x1xf32>
    %5 = vector.shape_cast %4 : vector<1x8x1xf32> to vector<8x1xf32>
    %c0_8 = arith.constant 0 : index
    %c0_9 = arith.constant 0 : index
    %c0_10 = arith.constant 0 : index
    %6 = vector.load %arg5[%c0_8, %c0_9, %c0_10] : memref<1x1x8xf32, #tpu.memory_space<vmem>>, vector<1x1x8xf32>
    %7 = vector.shape_cast %6 : vector<1x1x8xf32> to vector<1x8xf32>
    %c0_11 = arith.constant 0 : index
    %c0_12 = arith.constant 0 : index
    %c0_13 = arith.constant 0 : index
    %8 = vector.load %arg6[%c0_11, %c0_12, %c0_13] : memref<1x8x1xf32, #tpu.memory_space<vmem>>, vector<1x8x1xf32>
    %9 = vector.shape_cast %8 : vector<1x8x1xf32> to vector<8x1xf32>
    %cst = arith.constant 5.000000e-01 : f32
    %10 = vector.broadcast %cst : f32 to vector<8x1xf32>
    %11 = arith.cmpf ogt, %9, %10 : vector<8x1xf32>
    %c0_14 = arith.constant 0 : index
    %c0_15 = arith.constant 0 : index
    %12 = vector.load %arg7[%c0_14, %c0_15] : memref<1x32xf32, #tpu.memory_space<vmem>>, vector<1x32xf32>
    %13 = vector.broadcast %12 : vector<1x32xf32> to vector<8x32xf32>
    %14 = arith.mulf %1, %13 : vector<8x32xf32>
    %cst_16 = arith.constant dense<0.000000e+00> : vector<8x8xf32>
    %15 = tpu.matmul %14, %3, %cst_16 {dimension_numbers = #tpu.dot_dimension_numbers<[1], [1], [0], [0], [0, 0, 1, 0], [], []>} : vector<8x32xf32>, vector<8x32xf32>, vector<8x8xf32> -> vector<8x8xf32>
    %16 = vector.broadcast %5 : vector<8x1xf32> to vector<8x8xf32>
    %17 = arith.addf %15, %16 : vector<8x8xf32>
    %18 = vector.broadcast %7 : vector<1x8xf32> to vector<8x8xf32>
    %19 = arith.addf %17, %18 : vector<8x8xf32>
    %cst_17 = arith.constant -1.000000e+20 : f32
    %20 = vector.shape_cast %11 : vector<8x1xi1> to vector<8x1xi1>
    %21 = vector.broadcast %20 : vector<8x1xi1> to vector<8x8xi1>
    %22 = vector.broadcast %cst_17 : f32 to vector<8x8xf32>
    %23 = arith.select %21, %22, %19 : vector<8x8xi1>, vector<8x8xf32>
    %cst_18 = arith.constant dense<0xFF800000> : vector<8xf32>
    %24 = vector.multi_reduction <maximumf>, %23, %cst_18 [1] : vector<8x8xf32> to vector<8xf32>
    %25 = vector.shape_cast %24 : vector<8xf32> to vector<8x1xf32>
    %26 = vector.broadcast %25 : vector<8x1xf32> to vector<8x8xf32>
    %27 = arith.subf %23, %26 : vector<8x8xf32>
    %28 = math.exp %27 : vector<8x8xf32>
    %cst_19 = arith.constant dense<0.000000e+00> : vector<8xf32>
    %29 = vector.multi_reduction <add>, %28, %cst_19 [1] : vector<8x8xf32> to vector<8xf32>
    %30 = vector.shape_cast %29 : vector<8xf32> to vector<8x1xf32>
    %cst_20 = arith.constant dense<0.000000e+00> : vector<8x32xf32>
    %31 = tpu.matmul %28, %3, %cst_20 {dimension_numbers = #tpu.dot_dimension_numbers<[1], [0], [0], [1], [0, 0, 1, 1], [], []>} : vector<8x8xf32>, vector<8x32xf32>, vector<8x32xf32> -> vector<8x32xf32>
    %cst_21 = arith.constant 1.000000e+00 : f32
    %32 = vector.broadcast %cst_21 : f32 to vector<8x1xf32>
    %33 = arith.divf %32, %30 : vector<8x1xf32>
    %34 = vector.broadcast %33 : vector<8x1xf32> to vector<8x32xf32>
    %35 = arith.mulf %31, %34 : vector<8x32xf32>
    %c0_22 = arith.constant 0 : index
    %c0_23 = arith.constant 0 : index
    %c0_24 = arith.constant 0 : index
    %36 = vector.load %arg8[%c0_22, %c0_23, %c0_24] : memref<1x8x128xf32, #tpu.memory_space<vmem>>, vector<1x8x32xf32>
    %37 = vector.shape_cast %36 : vector<1x8x32xf32> to vector<8x32xf32>
    %38 = vector.shape_cast %1 : vector<8x32xf32> to vector<1x8x32xf32>
    tpu.vector_store %arg8[%c0_22, %c0_23, %c0_24], %38 {strides = array<i32>} : memref<1x8x128xf32, #tpu.memory_space<vmem>>, vector<1x8x32xf32>,
    %c0_25 = arith.constant 0 : index
    %c0_26 = arith.constant 0 : index
    %c32 = arith.constant 32 : index
    %39 = vector.load %arg8[%c0_25, %c0_26, %c32] : memref<1x8x128xf32, #tpu.memory_space<vmem>>, vector<1x8x32xf32>
    %40 = vector.shape_cast %39 : vector<1x8x32xf32> to vector<8x32xf32>
    %41 = vector.shape_cast %35 : vector<8x32xf32> to vector<1x8x32xf32>
    tpu.vector_store %arg8[%c0_25, %c0_26, %c32], %41 {strides = array<i32>} : memref<1x8x128xf32, #tpu.memory_space<vmem>>, vector<1x8x32xf32>,
    %42 = arith.mulf %1, %35 : vector<8x32xf32>
    %c0_27 = arith.constant 0 : index
    %c0_28 = arith.constant 0 : index
    %c64 = arith.constant 64 : index
    %43 = vector.load %arg8[%c0_27, %c0_28, %c64] : memref<1x8x128xf32, #tpu.memory_space<vmem>>, vector<1x8x32xf32>
    %44 = vector.shape_cast %43 : vector<1x8x32xf32> to vector<8x32xf32>
    %45 = vector.shape_cast %42 : vector<8x32xf32> to vector<1x8x32xf32>
    tpu.vector_store %arg8[%c0_27, %c0_28, %c64], %45 {strides = array<i32>} : memref<1x8x128xf32, #tpu.memory_space<vmem>>, vector<1x8x32xf32>,
    %c0_i32 = arith.constant 0 : i32
    %46 = arith.cmpi eq, %arg1, %c0_i32 : i32
    %47 = arith.extui %46 : i1 to i32
    %c0_i32_29 = arith.constant 0 : i32
    %48 = arith.cmpi ne, %47, %c0_i32_29 : i32
    scf.if %48 {
      %cst_47 = arith.constant 0xFF800000 : f32
      %74 = vector.broadcast %cst_47 : f32 to vector<1x1xf32>
      %c0_48 = arith.constant 0 : index
      %c0_49 = arith.constant 0 : index
      %75 = vector.load %arg11[%c0_48, %c0_49] : memref<1x1xf32, #tpu.memory_space<vmem>>, vector<1x1xf32>
      tpu.vector_store %arg11[%c0_48, %c0_49], %74 {strides = array<i32>} : memref<1x1xf32, #tpu.memory_space<vmem>>, vector<1x1xf32>,
      %cst_50 = arith.constant 0.000000e+00 : f32
      %76 = vector.broadcast %cst_50 : f32 to vector<1x1xf32>
      %c0_51 = arith.constant 0 : index
      %c0_52 = arith.constant 0 : index
      %77 = vector.load %arg12[%c0_51, %c0_52] : memref<1x1xf32, #tpu.memory_space<vmem>>, vector<1x1xf32>
      tpu.vector_store %arg12[%c0_51, %c0_52], %76 {strides = array<i32>} : memref<1x1xf32, #tpu.memory_space<vmem>>, vector<1x1xf32>,
      %cst_53 = arith.constant 0.000000e+00 : f32
      %78 = vector.broadcast %cst_53 : f32 to vector<1x32xf32>
      %c0_54 = arith.constant 0 : index
      %c0_55 = arith.constant 0 : index
      %79 = vector.load %arg10[%c0_54, %c0_55] : memref<1x32xf32, #tpu.memory_space<vmem>>, vector<1x32xf32>
      tpu.vector_store %arg10[%c0_54, %c0_55], %78 {strides = array<i32>} : memref<1x32xf32, #tpu.memory_space<vmem>>, vector<1x32xf32>,
    } else {
    }
    %cst_30 = arith.constant dense<0xFF800000> : vector<1xf32>
    %49 = vector.multi_reduction <maximumf>, %25, %cst_30 [0] : vector<8x1xf32> to vector<1xf32>
    %50 = vector.shape_cast %49 : vector<1xf32> to vector<1x1xf32>
    %c0_31 = arith.constant 0 : index
    %c0_32 = arith.constant 0 : index
    %51 = vector.load %arg11[%c0_31, %c0_32] : memref<1x1xf32, #tpu.memory_space<vmem>>, vector<1x1xf32>
    %52 = arith.maximumf %51, %50 : vector<1x1xf32>
    %53 = arith.subf %51, %52 : vector<1x1xf32>
    %54 = math.exp %53 : vector<1x1xf32>
    %55 = vector.broadcast %52 : vector<1x1xf32> to vector<8x1xf32>
    %56 = arith.subf %25, %55 : vector<8x1xf32>
    %57 = math.exp %56 : vector<8x1xf32>
    %c0_33 = arith.constant 0 : index
    %c0_34 = arith.constant 0 : index
    %58 = vector.load %arg12[%c0_33, %c0_34] : memref<1x1xf32, #tpu.memory_space<vmem>>, vector<1x1xf32>
    %59 = arith.mulf %54, %58 : vector<1x1xf32>
    %cst_35 = arith.constant dense<0.000000e+00> : vector<1xf32>
    %60 = vector.multi_reduction <add>, %57, %cst_35 [0] : vector<8x1xf32> to vector<1xf32>
    %61 = vector.shape_cast %60 : vector<1xf32> to vector<1x1xf32>
    %62 = arith.addf %59, %61 : vector<1x1xf32>
    %c0_36 = arith.constant 0 : index
    %c0_37 = arith.constant 0 : index
    %63 = vector.load %arg12[%c0_36, %c0_37] : memref<1x1xf32, #tpu.memory_space<vmem>>, vector<1x1xf32>
    tpu.vector_store %arg12[%c0_36, %c0_37], %62 {strides = array<i32>} : memref<1x1xf32, #tpu.memory_space<vmem>>, vector<1x1xf32>,
    %cst_38 = arith.constant dense<0.000000e+00> : vector<1x32xf32>
    %64 = tpu.matmul %57, %1, %cst_38 {dimension_numbers = #tpu.dot_dimension_numbers<[0], [0], [1], [1], [0, 1, 1, 1], [], []>} : vector<8x1xf32>, vector<8x32xf32>, vector<1x32xf32> -> vector<1x32xf32>
    %c0_39 = arith.constant 0 : index
    %c0_40 = arith.constant 0 : index
    %65 = vector.load %arg10[%c0_39, %c0_40] : memref<1x32xf32, #tpu.memory_space<vmem>>, vector<1x32xf32>
    %66 = vector.broadcast %54 : vector<1x1xf32> to vector<1x32xf32>
    %67 = arith.mulf %66, %65 : vector<1x32xf32>
    %68 = arith.addf %67, %64 : vector<1x32xf32>
    %c0_41 = arith.constant 0 : index
    %c0_42 = arith.constant 0 : index
    %69 = vector.load %arg10[%c0_41, %c0_42] : memref<1x32xf32, #tpu.memory_space<vmem>>, vector<1x32xf32>
    tpu.vector_store %arg10[%c0_41, %c0_42], %68 {strides = array<i32>} : memref<1x32xf32, #tpu.memory_space<vmem>>, vector<1x32xf32>,
    %c0_43 = arith.constant 0 : index
    %c0_44 = arith.constant 0 : index
    %70 = vector.load %arg11[%c0_43, %c0_44] : memref<1x1xf32, #tpu.memory_space<vmem>>, vector<1x1xf32>
    tpu.vector_store %arg11[%c0_43, %c0_44], %52 {strides = array<i32>} : memref<1x1xf32, #tpu.memory_space<vmem>>, vector<1x1xf32>,
    %c0_i32_45 = arith.constant 0 : i32
    %71 = arith.cmpi eq, %arg1, %c0_i32_45 : i32
    %72 = arith.extui %71 : i1 to i32
    %c0_i32_46 = arith.constant 0 : i32
    %73 = arith.cmpi ne, %72, %c0_i32_46 : i32
    scf.if %73 {
      %c0_47 = arith.constant 0 : index
      %c0_48 = arith.constant 0 : index
      %74 = vector.load %arg10[%c0_47, %c0_48] : memref<1x32xf32, #tpu.memory_space<vmem>>, vector<1x32xf32>
      %c0_49 = arith.constant 0 : index
      %c0_50 = arith.constant 0 : index
      %75 = vector.load %arg12[%c0_49, %c0_50] : memref<1x1xf32, #tpu.memory_space<vmem>>, vector<1x1xf32>
      %76 = vector.broadcast %75 : vector<1x1xf32> to vector<1x32xf32>
      %77 = arith.divf %74, %76 : vector<1x32xf32>
      %c0_51 = arith.constant 0 : index
      %c0_52 = arith.constant 0 : index
      %c0_53 = arith.constant 0 : index
      %78 = vector.load %arg9[%c0_51, %c0_52, %c0_53] : memref<1x1x32xf32, #tpu.memory_space<vmem>>, vector<1x1x32xf32>
      %79 = vector.shape_cast %78 : vector<1x1x32xf32> to vector<1x32xf32>
      %80 = vector.shape_cast %77 : vector<1x32xf32> to vector<1x1x32xf32>
      tpu.vector_store %arg9[%c0_51, %c0_52, %c0_53], %80 {strides = array<i32>} : memref<1x1x32xf32, #tpu.memory_space<vmem>>, vector<1x1x32xf32>,
    } else {
    }
    return
  }
  func.func @transform_0(%arg0: i32, %arg1: i32) -> (i32, i32, i32) {
    %c0_i32 = arith.constant 0 : i32
    %c0_i32_0 = arith.constant 0 : i32
    return %arg0, %arg1, %c0_i32 : i32, i32, i32
  }
  func.func @transform_1(%arg0: i32, %arg1: i32) -> (i32, i32, i32) {
    %c0_i32 = arith.constant 0 : i32
    %c0_i32_0 = arith.constant 0 : i32
    %c0_i32_1 = arith.constant 0 : i32
    return %arg0, %c0_i32, %c0_i32_0 : i32, i32, i32
  }
  func.func @transform_2(%arg0: i32, %arg1: i32) -> (i32, i32, i32) {
    %c0_i32 = arith.constant 0 : i32
    %c0_i32_0 = arith.constant 0 : i32
    return %arg0, %arg1, %c0_i32 : i32, i32, i32
  }
  func.func @transform_3(%arg0: i32, %arg1: i32) -> (i32, i32, i32) {
    %c0_i32 = arith.constant 0 : i32
    %c0_i32_0 = arith.constant 0 : i32
    %c0_i32_1 = arith.constant 0 : i32
    return %arg0, %c0_i32, %c0_i32_0 : i32, i32, i32
  }
  func.func @transform_4(%arg0: i32, %arg1: i32) -> (i32, i32, i32) {
    %c0_i32 = arith.constant 0 : i32
    %c0_i32_0 = arith.constant 0 : i32
    return %arg0, %arg1, %c0_i32 : i32, i32, i32
  }
  func.func @transform_5(%arg0: i32, %arg1: i32) -> (i32, i32) {
    %c0_i32 = arith.constant 0 : i32
    %c0_i32_0 = arith.constant 0 : i32
    %c0_i32_1 = arith.constant 0 : i32
    return %c0_i32, %c0_i32_0 : i32, i32
  }
  func.func @transform_6(%arg0: i32, %arg1: i32) -> (i32, i32, i32) {
    %c0_i32 = arith.constant 0 : i32
    %c0_i32_0 = arith.constant 0 : i32
    return %arg0, %arg1, %c0_i32 : i32, i32, i32
  }
  func.func @transform_7(%arg0: i32, %arg1: i32) -> (i32, i32, i32) {
    %c0_i32 = arith.constant 0 : i32
    %c0_i32_0 = arith.constant 0 : i32
    %c0_i32_1 = arith.constant 0 : i32
    return %arg0, %c0_i32, %c0_i32_0 : i32, i32, i32
  }
}

</mosaic_0001>

<llo_original>
// kernel: tpu_custom_call.1
$region0: #{tpu_custom_call.1}
  #allocation0 [shape = 'u32[]', space=smem, size = 0x4, offset = 0x4, fixed_abs, tag = 'smem constant byte address 0x4 - core index']
  #allocation1 [shape = 'u32[144,128]{1,0:T(1,128)}', space=vmem, size = 0x12000, scoped, tag = 'internal scratch']
  #allocation2 [shape = 'f32[1,32]{1,0:T(1,128)}', space=vmem, size = 0x200, scoped, tag = 'scratch operand']
  #allocation3 [shape = 'f32[1,1]{1,0:T(1,128)}', space=vmem, size = 0x200, scoped, tag = 'scratch operand']
  #allocation4 [shape = 'f32[1,1]{1,0:T(1,128)}', space=vmem, size = 0x200, scoped, tag = 'scratch operand']
  %s0 = inlined_call_operand.vmem [shape: f32[2,8,32], index: 0, kind: input, shape index: {}]
  %s1 = inlined_call_operand.vmem [shape: f32[2,8,32], index: 1, kind: input, shape index: {}]
  %s2 = inlined_call_operand.vmem [shape: f32[2,8,1], index: 2, kind: input, shape index: {}]
  %s3 = inlined_call_operand.vmem [shape: f32[2,1,8], index: 3, kind: input, shape index: {}]
  %s4 = inlined_call_operand.vmem [shape: f32[2,8,1], index: 4, kind: input, shape index: {}]
  %s5 = inlined_call_operand.vmem [shape: f32[1,32], index: 5, kind: input, shape index: {}]
  %s6 = inlined_call_operand.hbm [shape: f32[2,8,128], index: 6, kind: output, shape index: {0}]
  %s7 = inlined_call_operand.hbm [shape: f32[2,1,32], index: 7, kind: output, shape index: {1}]
  %8 = xla_tuple %s6, %s7
  %s9 = sld [smem:[#allocation0]]
  $region73: #{tpu_custom_call.1} parent=0
    _
  %s11 = ssub.s32 1, %s9
  %s12 = scalar_select 0, %s11, %s9
  $region1: #{tpu_custom_call.1} parent=0
    #allocation5 [shape = 'u8[8192]{0}', space=vmem, size = 0x2000, scoped, tag = 'output window, operand 0']
    #allocation6 [shape = 's32[2]{0}', space=sflag, size = 0x8, scoped, tag = 'scoped memory for tpu_custom_call.1']
    #allocation7 [shape = 'u8[1024]{0}', space=vmem, size = 0x400, scoped, tag = 'output window, operand 1']
    #allocation8 [shape = 's32[2]{0}', space=sflag, size = 0x8, scoped, tag = 'scoped memory for tpu_custom_call.1']
    %13 = vsyncpa [#allocation6], 0
    %s14 = scalar_lea.sflag [#allocation6], 1
    %15 = vsyncpa %s14, 0
    %16 = vsyncpa [#allocation8], 0
    %s17 = scalar_lea.sflag [#allocation8], 1
    %18 = vsyncpa %s17, 0
    loop: start=0, step=1, limit=4
    $region2: #{tpu_custom_call.1} parent=1 // loop_pre_header
      _
    $region3: #{tpu_custom_call.1} parent=1 // loop_header
      %s20 = sphi 0, %s24
      %p21 = scmp.ge.s32.totalorder %s20, 4
      %s27 = sphi 0, %s39
      %s28 = sphi 0, %s35
      %s29 = sphi 0, %s27
      %s30 = sphi 0, %s28
      %s31 = sphi 0, %s29
      %s32 = sphi 0, %s30
      %s44 = sphi 0, %s46
      %s47 = sphi 0, %s44
      %s48 = sphi 0, %s47
      %s64 = sphi 0, %s48
      %s70 = sphi 0, %s72
      %s73 = sphi 0, %s70
      %s74 = sphi 0, %s73
      %s90 = sphi 0, %s74
      %s98 = sphi 0, %s100
      %s101 = sphi 0, %s98
      %s102 = sphi 0, %s101
      %s118 = sphi 0, %s102
      %s124 = sphi 0, %s126
      %s127 = sphi 0, %s124
      %s128 = sphi 0, %s127
      %s144 = sphi 0, %s128
      %s152 = sphi 0, %s154
      %s155 = sphi 0, %s152
      %s156 = sphi 0, %s155
      %s172 = sphi 0, %s156
      %s176 = sphi 0, %s176
      %s178 = sphi 0, %s176
      %s179 = sphi 0, %s178
      %s193 = sphi 0, %s179
      %s201 = sphi 0, %s203
      %s204 = sphi 0, %s201
      %s205 = sphi 0, %s204
      %s221 = sphi 0, %s205
      %s227 = sphi 0, %s229
      %s230 = sphi 0, %s227
      %s231 = sphi 0, %s230
      %s247 = sphi 0, %s231
    $region4: #{tpu_custom_call.1} parent=1 // loop_header_branch
      %23 = sbr.rel (%p21) target = $region8
    $region5: #{tpu_custom_call.1} parent=1 // loop_body
      %s25 = ssub.s32 %s20, 1
      %s26 = ssub.s32 %s20, 2
      %s33 = sadd.s32 1, %s28
      %p34 = scmp.ge.s32.totalorder %s33, 1
      %s35 = scalar_select %p34, 0, %s33
      %s36 = sadd.s32 1, %s27
      %s37 = scalar_select %p34, %s36, %s27
      %p38 = scmp.ge.s32.totalorder %s37, 2
      %s39 = scalar_select %p38, 0, %s37
      %s40 = ssub.s32 %s27, %s39
      %s41 = ssub.s32 %s28, %s35
      %s42 = sor.u32 %s40, %s41
      %p43 = scmp.eq.s32.totalorder %s42, 0
      %s45 = sadd.s32 %s44, 1
      %s46 = scalar_select %p43, %s44, %s45
      %p49 = pneg %p43
      %p50 = scmp.eq.s32.totalorder %s20, 1
      %p51 = por %p49, %p50
      %p52 = scmp.ne.s32.totalorder %s44, %s47
      %p53 = scmp.eq.s32.totalorder %s20, 0
      %p54 = por %p52, %p53
      %p55 = scmp.ne.s32.totalorder %s44, %s47
      %p56 = scmp.eq.s32.totalorder %s25, 1
      %p57 = por %p55, %p56
      %p58 = scmp.ne.s32.totalorder %s47, %s48
      %p59 = scmp.eq.s32.totalorder %s25, 0
      %p60 = por %p58, %p59
      %p61 = scmp.ne.s32.totalorder %s47, %s48
      %p62 = scmp.eq.s32.totalorder %s26, 1
      %p63 = por %p61, %p62
      %p65 = scmp.ne.s32.totalorder %s48, %s64
      %p66 = scmp.eq.s32.totalorder %s26, 0
      %p67 = por %p65, %p66
      %s68 = ssub.s32 %s27, %s39
      %p69 = scmp.eq.s32.totalorder %s68, 0
      %s71 = sadd.s32 %s70, 1
      %s72 = scalar_select %p69, %s70, %s71
      %p75 = pneg %p69
      %p76 = scmp.eq.s32.totalorder %s20, 1
      %p77 = por %p75, %p76
      %p78 = scmp.ne.s32.totalorder %s70, %s73
      %p79 = scmp.eq.s32.totalorder %s20, 0
      %p80 = por %p78, %p79
      %p81 = scmp.ne.s32.totalorder %s70, %s73
      %p82 = scmp.eq.s32.totalorder %s25, 1
      %p83 = por %p81, %p82
      %p84 = scmp.ne.s32.totalorder %s73, %s74
      %p85 = scmp.eq.s32.totalorder %s25, 0
      %p86 = por %p84, %p85
      %p87 = scmp.ne.s32.totalorder %s73, %s74
      %p88 = scmp.eq.s32.totalorder %s26, 1
      %p89 = por %p87, %p88
      %p91 = scmp.ne.s32.totalorder %s74, %s90
      %p92 = scmp.eq.s32.totalorder %s26, 0
      %p93 = por %p91, %p92
      %s94 = ssub.s32 %s27, %s39
      %s95 = ssub.s32 %s28, %s35
      %s96 = sor.u32 %s94, %s95
      %p97 = scmp.eq.s32.totalorder %s96, 0
      %s99 = sadd.s32 %s98, 1
      %s100 = scalar_select %p97, %s98, %s99
      %p103 = pneg %p97
      %p104 = scmp.eq.s32.totalorder %s20, 1
      %p105 = por %p103, %p104
      %p106 = scmp.ne.s32.totalorder %s98, %s101
      %p107 = scmp.eq.s32.totalorder %s20, 0
      %p108 = por %p106, %p107
      %p109 = scmp.ne.s32.totalorder %s98, %s101
      %p110 = scmp.eq.s32.totalorder %s25, 1
      %p111 = por %p109, %p110
      %p112 = scmp.ne.s32.totalorder %s101, %s102
      %p113 = scmp.eq.s32.totalorder %s25, 0
      %p114 = por %p112, %p113
      %p115 = scmp.ne.s32.totalorder %s101, %s102
      %p116 = scmp.eq.s32.totalorder %s26, 1
      %p117 = por %p115, %p116
      %p119 = scmp.ne.s32.totalorder %s102, %s118
      %p120 = scmp.eq.s32.totalorder %s26, 0
      %p121 = por %p119, %p120
      %s122 = ssub.s32 %s27, %s39
      %p123 = scmp.eq.s32.totalorder %s122, 0
      %s125 = sadd.s32 %s124, 1
      %s126 = scalar_select %p123, %s124, %s125
      %p129 = pneg %p123
      %p130 = scmp.eq.s32.totalorder %s20, 1
      %p131 = por %p129, %p130
      %p132 = scmp.ne.s32.totalorder %s124, %s127
      %p133 = scmp.eq.s32.totalorder %s20, 0
      %p134 = por %p132, %p133
      %p135 = scmp.ne.s32.totalorder %s124, %s127
      %p136 = scmp.eq.s32.totalorder %s25, 1
      %p137 = por %p135, %p136
      %p138 = scmp.ne.s32.totalorder %s127, %s128
      %p139 = scmp.eq.s32.totalorder %s25, 0
      %p140 = por %p138, %p139
      %p141 = scmp.ne.s32.totalorder %s127, %s128
      %p142 = scmp.eq.s32.totalorder %s26, 1
      %p143 = por %p141, %p142
      %p145 = scmp.ne.s32.totalorder %s128, %s144
      %p146 = scmp.eq.s32.totalorder %s26, 0
      %p147 = por %p145, %p146
      %s148 = ssub.s32 %s27, %s39
      %s149 = ssub.s32 %s28, %s35
      %s150 = sor.u32 %s148, %s149
      %p151 = scmp.eq.s32.totalorder %s150, 0
      %s153 = sadd.s32 %s152, 1
      %s154 = scalar_select %p151, %s152, %s153
      %p157 = pneg %p151
      %p158 = scmp.eq.s32.totalorder %s20, 1
      %p159 = por %p157, %p158
      %p160 = scmp.ne.s32.totalorder %s152, %s155
      %p161 = scmp.eq.s32.totalorder %s20, 0
      %p162 = por %p160, %p161
      %p163 = scmp.ne.s32.totalorder %s152, %s155
      %p164 = scmp.eq.s32.totalorder %s25, 1
      %p165 = por %p163, %p164
      %p166 = scmp.ne.s32.totalorder %s155, %s156
      %p167 = scmp.eq.s32.totalorder %s25, 0
      %p168 = por %p166, %p167
      %p169 = scmp.ne.s32.totalorder %s155, %s156
      %p170 = scmp.eq.s32.totalorder %s26, 1
      %p171 = por %p169, %p170
      %p173 = scmp.ne.s32.totalorder %s156, %s172
      %p174 = scmp.eq.s32.totalorder %s26, 0
      %p175 = por %p173, %p174
      %s177 = sadd.s32 %s176, 1
      %p180 = scmp.eq.s32.totalorder %s20, 1
      %p181 = scmp.ne.s32.totalorder %s176, %s178
      %p182 = scmp.eq.s32.totalorder %s20, 0
      %p183 = por %p181, %p182
      %p184 = scmp.ne.s32.totalorder %s176, %s178
      %p185 = scmp.eq.s32.totalorder %s25, 1
      %p186 = por %p184, %p185
      %p187 = scmp.ne.s32.totalorder %s178, %s179
      %p188 = scmp.eq.s32.totalorder %s25, 0
      %p189 = por %p187, %p188
      %p190 = scmp.ne.s32.totalorder %s178, %s179
      %p191 = scmp.eq.s32.totalorder %s26, 1
      %p192 = por %p190, %p191
      %p194 = scmp.ne.s32.totalorder %s179, %s193
      %p195 = scmp.eq.s32.totalorder %s26, 0
      %p196 = por %p194, %p195
      %s197 = ssub.s32 %s27, %s39
      %s198 = ssub.s32 %s28, %s35
      %s199 = sor.u32 %s197, %s198
      %p200 = scmp.eq.s32.totalorder %s199, 0
      %s202 = sadd.s32 %s201, 1
      %s203 = scalar_select %p200, %s201, %s202
      %p206 = pneg %p200
      %p207 = scmp.eq.s32.totalorder %s20, 1
      %p208 = por %p206, %p207
      %p209 = scmp.ne.s32.totalorder %s201, %s204
      %p210 = scmp.eq.s32.totalorder %s20, 0
      %p211 = por %p209, %p210
      %p212 = scmp.ne.s32.totalorder %s201, %s204
      %p213 = scmp.eq.s32.totalorder %s25, 1
      %p214 = por %p212, %p213
      %p215 = scmp.ne.s32.totalorder %s204, %s205
      %p216 = scmp.eq.s32.totalorder %s25, 0
      %p217 = por %p215, %p216
      %p218 = scmp.ne.s32.totalorder %s204, %s205
      %p219 = scmp.eq.s32.totalorder %s26, 1
      %p220 = por %p218, %p219
      %p222 = scmp.ne.s32.totalorder %s205, %s221
      %p223 = scmp.eq.s32.totalorder %s26, 0
      %p224 = por %p222, %p223
      %s225 = ssub.s32 %s27, %s39
      %p226 = scmp.eq.s32.totalorder %s225, 0
      %s228 = sadd.s32 %s227, 1
      %s229 = scalar_select %p226, %s227, %s228
      %p232 = pneg %p226
      %p233 = scmp.eq.s32.totalorder %s20, 1
      %p234 = por %p232, %p233
      %p235 = scmp.ne.s32.totalorder %s227, %s230
      %p236 = scmp.eq.s32.totalorder %s20, 0
      %p237 = por %p235, %p236
      %p238 = scmp.ne.s32.totalorder %s227, %s230
      %p239 = scmp.eq.s32.totalorder %s25, 1
      %p240 = por %p238, %p239
      %p241 = scmp.ne.s32.totalorder %s230, %s231
      %p242 = scmp.eq.s32.totalorder %s25, 0
      %p243 = por %p241, %p242
      %p244 = scmp.ne.s32.totalorder %s230, %s231
      %p245 = scmp.eq.s32.totalorder %s26, 1
      %p246 = por %p244, %p245
      %p248 = scmp.ne.s32.totalorder %s231, %s247
      %p249 = scmp.eq.s32.totalorder %s26, 0
      %p250 = por %p248, %p249
      %p251 = scmp.le.s32.totalorder 1, %s20
      %p252 = scmp.lt.s32.totalorder %s20, 3
      %p253 = pnand %p251, %p252
      %p254 = pneg %p253
      // Predicated region
      $region9: #{tpu_custom_call.1} parent=5 // pred_check
        _
      $region10: #{tpu_custom_call.1} parent=5 // pred_check_branch
        %256 = sbr.rel (%p253) target = $region12
      $region11: #{tpu_custom_call.1} parent=5 // pred_region
        %s257 = ssub.s32 %s20, 1
        // Predicated region
        $region13: #{tpu_custom_call.1} parent=11 // pred_check
          %p258 = pneg %p189
        $region14: #{tpu_custom_call.1} parent=11 // pred_check_branch
          %260 = sbr.rel (%p258) target = $region16
        $region15: #{tpu_custom_call.1} parent=11 // pred_region
          _
        $region16: #{tpu_custom_call.1} parent=11 // pred_fallthru
          _
      $region12: #{tpu_custom_call.1} parent=5 // pred_fallthru
        _
      %p261 = scmp.lt.s32.totalorder %s20, 2
      // Predicated region
      $region17: #{tpu_custom_call.1} parent=5 // pred_check
        %p262 = pneg %p261
      $region18: #{tpu_custom_call.1} parent=5 // pred_check_branch
        %264 = sbr.rel (%p262) target = $region20
      $region19: #{tpu_custom_call.1} parent=5 // pred_region
        // Predicated region
        $region21: #{tpu_custom_call.1} parent=19 // pred_check
          %p265 = pneg %p54
        $region22: #{tpu_custom_call.1} parent=19 // pred_check_branch
          %267 = sbr.rel (%p265) target = $region24
        $region23: #{tpu_custom_call.1} parent=19 // pred_region
          %p268 = scmp.lt.s32.totalorder %s27, 1
          %s269 = scalar_select %p268, %s27, 1
          %p270 = scmp.lt.s32.totalorder %s28, 0
          %s271 = scalar_select %p270, %s28, 0
          %s272 = sadd.s32 %s271, %s269
          %s273 = smul.addr %s272, 8
          %s274 = scalar_lea.vmem %s0, %s273
        $region24: #{tpu_custom_call.1} parent=19 // pred_fallthru
          _
        // Predicated region
        $region25: #{tpu_custom_call.1} parent=19 // pred_check
          %p275 = pneg %p80
        $region26: #{tpu_custom_call.1} parent=19 // pred_check_branch
          %277 = sbr.rel (%p275) target = $region28
        $region27: #{tpu_custom_call.1} parent=19 // pred_region
          %p278 = scmp.lt.s32.totalorder %s27, 1
          %s279 = scalar_select %p278, %s27, 1
          %s280 = smul.addr %s279, 8
          %s281 = scalar_lea.vmem %s1, %s280
        $region28: #{tpu_custom_call.1} parent=19 // pred_fallthru
          _
        // Predicated region
        $region29: #{tpu_custom_call.1} parent=19 // pred_check
          %p282 = pneg %p108
        $region30: #{tpu_custom_call.1} parent=19 // pred_check_branch
          %284 = sbr.rel (%p282) target = $region32
        $region31: #{tpu_custom_call.1} parent=19 // pred_region
          %p285 = scmp.lt.s32.totalorder %s27, 1
          %s286 = scalar_select %p285, %s27, 1
          %p287 = scmp.lt.s32.totalorder %s28, 0
          %s288 = scalar_select %p287, %s28, 0
          %s289 = sadd.s32 %s288, %s286
          %s290 = smul.addr %s289, 8
          %s291 = scalar_lea.vmem %s2, %s290
        $region32: #{tpu_custom_call.1} parent=19 // pred_fallthru
          _
        // Predicated region
        $region33: #{tpu_custom_call.1} parent=19 // pred_check
          %p292 = pneg %p134
        $region34: #{tpu_custom_call.1} parent=19 // pred_check_branch
          %294 = sbr.rel (%p292) target = $region36
        $region35: #{tpu_custom_call.1} parent=19 // pred_region
          %p295 = scmp.lt.s32.totalorder %s27, 1
          %s296 = scalar_select %p295, %s27, 1
          %s297 = scalar_lea.vmem %s3, %s296
        $region36: #{tpu_custom_call.1} parent=19 // pred_fallthru
          _
        // Predicated region
        $region37: #{tpu_custom_call.1} parent=19 // pred_check
          %p298 = pneg %p162
        $region38: #{tpu_custom_call.1} parent=19 // pred_check_branch
          %300 = sbr.rel (%p298) target = $region40
        $region39: #{tpu_custom_call.1} parent=19 // pred_region
          %p301 = scmp.lt.s32.totalorder %s27, 1
          %s302 = scalar_select %p301, %s27, 1
          %p303 = scmp.lt.s32.totalorder %s28, 0
          %s304 = scalar_select %p303, %s28, 0
          %s305 = sadd.s32 %s304, %s302
          %s306 = smul.addr %s305, 8
          %s307 = scalar_lea.vmem %s4, %s306
        $region40: #{tpu_custom_call.1} parent=19 // pred_fallthru
          _
      $region20: #{tpu_custom_call.1} parent=5 // pred_fallthru
        _
      %p308 = scmp.le.s32.totalorder 1, %s20
      %p309 = scmp.lt.s32.totalorder %s20, 3
      %p310 = pnand %p308, %p309
      %p311 = pneg %p310
      // Predicated region
      $region41: #{tpu_custom_call.1} parent=5 // pred_check
        _
      $region42: #{tpu_custom_call.1} parent=5 // pred_check_branch
        %313 = sbr.rel (%p310) target = $region44
      $region43: #{tpu_custom_call.1} parent=5 // pred_region
        %s314 = ssub.s32 %s20, 1
        %p315 = scmp.lt.s32.totalorder %s29, 1
        %s316 = scalar_select %p315, %s29, 1
        %p317 = scmp.lt.s32.totalorder %s30, 0
        %s318 = scalar_select %p317, %s30, 0
        %s319 = sadd.s32 %s318, %s316
        %s320 = smul.addr %s319, 8
        %s321 = scalar_lea.vmem %s0, %s320
        %p322 = pneg %p60
        %p323 = pneg %p57
        %p324 = scmp.lt.s32.totalorder %s29, 1
        %s325 = scalar_select %p324, %s29, 1
        %s326 = smul.addr %s325, 8
        %s327 = scalar_lea.vmem %s1, %s326
        %p328 = pneg %p86
        %p329 = pneg %p83
        %p330 = scmp.lt.s32.totalorder %s29, 1
        %s331 = scalar_select %p330, %s29, 1
        %p332 = scmp.lt.s32.totalorder %s30, 0
        %s333 = scalar_select %p332, %s30, 0
        %s334 = sadd.s32 %s333, %s331
        %s335 = smul.addr %s334, 8
        %s336 = scalar_lea.vmem %s2, %s335
        %p337 = pneg %p114
        %p338 = pneg %p111
        %p339 = scmp.lt.s32.totalorder %s29, 1
        %s340 = scalar_select %p339, %s29, 1
        %s341 = scalar_lea.vmem %s3, %s340
        %p342 = pneg %p140
        %p343 = pneg %p137
        %p344 = scmp.lt.s32.totalorder %s29, 1
        %s345 = scalar_select %p344, %s29, 1
        %p346 = scmp.lt.s32.totalorder %s30, 0
        %s347 = scalar_select %p346, %s30, 0
        %s348 = sadd.s32 %s347, %s345
        %s349 = smul.addr %s348, 8
        %s350 = scalar_lea.vmem %s4, %s349
        %p351 = pneg %p168
        %p352 = pneg %p165
        %p353 = pneg %p189
        %p354 = pneg %p186
        %p355 = pneg %p217
        %p356 = pneg %p214
        %s357 = sand.u32 %s204, 1
        %s358 = scalar_lea.sflag [#allocation6], %s357
        %s359 = sand.u32 %s204, 1
        %s360 = smul.addr %s359, 8
        %s361 = scalar_lea.vmem [#allocation5], %s360
        %p362 = pneg %p243
        %p363 = pneg %p240
        %s364 = sand.u32 %s230, 1
        %s365 = scalar_lea.sflag [#allocation8], %s364
        %s366 = sand.u32 %s230, 1
        %s367 = scalar_lea.vmem [#allocation7], %s366
        %p368 = scmp.lt.s32.totalorder %s29, 1
        %s369 = scalar_select %p368, %s29, 1
        %p370 = scmp.lt.s32.totalorder %s30, 0
        %s371 = scalar_select %p370, %s30, 0
        %s372 = sadd.s32 %s371, %s369
        %s373 = smul.addr %s372, 8
        %s374 = scalar_lea.vmem %s0, %s373
        %p375 = scmp.lt.s32.totalorder %s29, 1
        %s376 = scalar_select %p375, %s29, 1
        %s377 = smul.addr %s376, 8
        %s378 = scalar_lea.vmem %s1, %s377
        %p379 = scmp.lt.s32.totalorder %s29, 1
        %s380 = scalar_select %p379, %s29, 1
        %p381 = scmp.lt.s32.totalorder %s30, 0
        %s382 = scalar_select %p381, %s30, 0
        %s383 = sadd.s32 %s382, %s380
        %s384 = smul.addr %s383, 8
        %s385 = scalar_lea.vmem %s2, %s384
        %p386 = scmp.lt.s32.totalorder %s29, 1
        %s387 = scalar_select %p386, %s29, 1
        %s388 = scalar_lea.vmem %s3, %s387
        %p389 = scmp.lt.s32.totalorder %s29, 1
        %s390 = scalar_select %p389, %s29, 1
        %p391 = scmp.lt.s32.totalorder %s30, 0
        %s392 = scalar_select %p391, %s30, 0
        %s393 = sadd.s32 %s392, %s390
        %s394 = smul.addr %s393, 8
        %s395 = scalar_lea.vmem %s4, %s394
        %v396 = vld [vmem:[%s374] sm:$0xff]
        %v397 = vld [vmem:[%s378] sm:$0xff]
        %v398 = vld [vmem:[%s385] sm:$0xff]
        %v399 = vld [vmem:[%s388] sm:$0x1]
        %v400 = vld [vmem:[%s395] sm:$0xff]
        %vm401 = vcmp.gt.f32.partialorder %v400, 0.5
        %v402 = vld [vmem:[%s5] sm:$0x1]
        %v404 = vlaneseq
        %v405 = vshrl.u32 %v404, 7
        %v406 = vsub.s32 0, %v405
        %v407 = vrot.slane %v402, %v406
        %v409 = vmul.f32 %v396, %v407
        %411 = vset.pattern.permute.xlu0 0
        %412 = vperm.xlu0 %411, %v398
        %v413 = vpop.permute.xlu0 %412
        %vm415 = vcmask 261120
        %v417 = vsel %vm415, %v409, 0
        %v420 = vsel %vm415, %v397, 0
        %422 = vmatprep.subr.mxu0 0.0
        %423 = vmatpush1.xpose.msra.mxu0 0.0
        %424 = vmatprep.subr.mxu0 0.0
        %425 = vmatpush1.xpose.msra.mxu0 0.0
        %426 = vmatprep.subr.mxu0 0.0
        %427 = vmatpush1.xpose.msra.mxu0 0.0
        %428 = vmatprep.subr.mxu0 0.0
        %429 = vmatpush1.xpose.msra.mxu0 0.0
        %430 = vmatprep.subr.mxu0 0.0
        %431 = vmatpush1.xpose.msra.mxu0 0.0
        %432 = vmatprep.subr.mxu0 0.0
        %433 = vmatpush1.xpose.msra.mxu0 0.0
        %434 = vmatprep.subr.mxu0 0.0
        %435 = vmatpush1.xpose.msra.mxu0 0.0
        %436 = vmatprep.subr.mxu0 0.0
        %437 = vmatpush1.xpose.msra.mxu0 0.0
        %438 = vmatprep.subr.mxu0 0.0
        %439 = vmatpush1.xpose.msra.mxu0 0.0
        %440 = vmatprep.subr.mxu0 0.0
        %441 = vmatpush1.xpose.msra.mxu0 0.0
        %442 = vmatprep.subr.mxu0 0.0
        %443 = vmatpush1.xpose.msra.mxu0 0.0
        %444 = vmatprep.subr.mxu0 0.0
        %445 = vmatpush1.xpose.msra.mxu0 0.0
        %446 = vmatprep.subr.mxu0 0.0
        %447 = vmatpush1.xpose.msra.mxu0 0.0
        %448 = vmatprep.subr.mxu0 0.0
        %449 = vmatpush1.xpose.msra.mxu0 0.0
        %450 = vmatprep.subr.mxu0 0.0
        %451 = vmatpush1.xpose.msra.mxu0 0.0
        %452 = vmatprep.subr.mxu0 0.0
        %453 = vmatpush1.xpose.msra.mxu0 %v420
        %454 = vmatprep.subr.mxu0 0.0
        %455 = vmatpush2.xpose.msra.mxu0 0.0
        %456 = vmatprep.subr.mxu0 0.0
        %457 = vmatpush2.xpose.msra.mxu0 0.0
        %458 = vmatprep.subr.mxu0 0.0
        %459 = vmatpush2.xpose.msra.mxu0 0.0
        %460 = vmatprep.subr.mxu0 0.0
        %461 = vmatpush2.xpose.msra.mxu0 0.0
        %462 = vmatprep.subr.mxu0 0.0
        %463 = vmatpush2.xpose.msra.mxu0 0.0
        %464 = vmatprep.subr.mxu0 0.0
        %465 = vmatpush2.xpose.msra.mxu0 0.0
        %466 = vmatprep.subr.mxu0 0.0
        %467 = vmatpush2.xpose.msra.mxu0 0.0
        %468 = vmatprep.subr.mxu0 0.0
        %469 = vmatpush2.xpose.msra.mxu0 0.0
        %470 = vmatprep.subr.mxu0 0.0
        %471 = vmatpush2.xpose.msra.mxu0 0.0
        %472 = vmatprep.subr.mxu0 0.0
        %473 = vmatpush2.xpose.msra.mxu0 0.0
        %474 = vmatprep.subr.mxu0 0.0
        %475 = vmatpush2.xpose.msra.mxu0 0.0
        %476 = vmatprep.subr.mxu0 0.0
        %477 = vmatpush2.xpose.msra.mxu0 0.0
        %478 = vmatprep.subr.mxu0 0.0
        %479 = vmatpush2.xpose.msra.mxu0 0.0
        %480 = vmatprep.subr.mxu0 0.0
        %481 = vmatpush2.xpose.msra.mxu0 0.0
        %482 = vmatprep.subr.mxu0 0.0
        %483 = vmatpush2.xpose.msra.mxu0 0.0
        %484 = vmatprep.subr.mxu0 0.0
        %485 = vmatpush2.xpose.msra.mxu0 0.0
        %486 = vmatprep.mubr.f32.mxu0 0.0
        %487 = vmatmul.mubr.f32.gmra.mxu0 %v417
        %v488 = vpop.f32.mrf.mxu0
        %v489 = vadd.f32 %v413, %v488
        %v490 = vpop.f32.mrf.mxu0
        %491 = vdwg.mxu0
        %v493 = vlaneseq
        %v494 = vshrl.u32 %v493, 7
        %v495 = vsub.s32 0, %v494
        %v496 = vrot.slane %v399, %v495
        %v498 = vadd.f32 %v489, %v496
        %v499 = vsel %vm401, 1, 0
        %500 = vset.pattern.permute.xlu0 0
        %501 = vperm.xlu0 %500, %v499
        %v502 = vpop.permute.xlu0 %501
        %vm503 = vcmp.eq.s32.totalorder %v502, 1
        %v504 = vsel %vm503, -1e+20, %v498
        %vm505 = vcmask 64512
        %v506 = vsel %vm505, %v504, -inf
        %507 = vmax.xlane.f32.xlu0 %v506
        %v508 = vpop.xlane.xlu0 %507
        %v509 = vsub.f32 %v504, %v508
        %v510 = vmul.f32 %v509, 1.442695
        %v511 = vpow.pop %v510
        %v512 = vsel %vm505, %v511, 0.0
        %513 = vadd.xlane.f32.xlu0 %v512
        %v514 = vpop.xlane.xlu0 %513
        %v516 = vsel %vm505, %v511, 0
        %518 = vmatprep.subr.mxu0 0.0
        %519 = vmatpush1.msra.mxu0 0.0
        %520 = vmatprep.subr.mxu0 0.0
        %521 = vmatpush1.msra.mxu0 0.0
        %522 = vmatprep.subr.mxu0 0.0
        %523 = vmatpush1.msra.mxu0 0.0
        %524 = vmatprep.subr.mxu0 0.0
        %525 = vmatpush1.msra.mxu0 0.0
        %526 = vmatprep.subr.mxu0 0.0
        %527 = vmatpush1.msra.mxu0 0.0
        %528 = vmatprep.subr.mxu0 0.0
        %529 = vmatpush1.msra.mxu0 0.0
        %530 = vmatprep.subr.mxu0 0.0
        %531 = vmatpush1.msra.mxu0 0.0
        %532 = vmatprep.subr.mxu0 0.0
        %533 = vmatpush1.msra.mxu0 0.0
        %534 = vmatprep.subr.mxu0 0.0
        %535 = vmatpush1.msra.mxu0 0.0
        %536 = vmatprep.subr.mxu0 0.0
        %537 = vmatpush1.msra.mxu0 0.0
        %538 = vmatprep.subr.mxu0 0.0
        %539 = vmatpush1.msra.mxu0 0.0
        %540 = vmatprep.subr.mxu0 0.0
        %541 = vmatpush1.msra.mxu0 0.0
        %542 = vmatprep.subr.mxu0 0.0
        %543 = vmatpush1.msra.mxu0 0.0
        %544 = vmatprep.subr.mxu0 0.0
        %545 = vmatpush1.msra.mxu0 0.0
        %546 = vmatprep.subr.mxu0 0.0
        %547 = vmatpush1.msra.mxu0 0.0
        %548 = vmatprep.subr.mxu0 0.0
        %549 = vmatpush1.msra.mxu0 %v397
        %550 = vmatprep.subr.mxu0 0.0
        %551 = vmatpush2.msra.mxu0 0.0
        %552 = vmatprep.subr.mxu0 0.0
        %553 = vmatpush2.msra.mxu0 0.0
        %554 = vmatprep.subr.mxu0 0.0
        %555 = vmatpush2.msra.mxu0 0.0
        %556 = vmatprep.subr.mxu0 0.0
        %557 = vmatpush2.msra.mxu0 0.0
        %558 = vmatprep.subr.mxu0 0.0
        %559 = vmatpush2.msra.mxu0 0.0
        %560 = vmatprep.subr.mxu0 0.0
        %561 = vmatpush2.msra.mxu0 0.0
        %562 = vmatprep.subr.mxu0 0.0
        %563 = vmatpush2.msra.mxu0 0.0
        %564 = vmatprep.subr.mxu0 0.0
        %565 = vmatpush2.msra.mxu0 0.0
        %566 = vmatprep.subr.mxu0 0.0
        %567 = vmatpush2.msra.mxu0 0.0
        %568 = vmatprep.subr.mxu0 0.0
        %569 = vmatpush2.msra.mxu0 0.0
        %570 = vmatprep.subr.mxu0 0.0
        %571 = vmatpush2.msra.mxu0 0.0
        %572 = vmatprep.subr.mxu0 0.0
        %573 = vmatpush2.msra.mxu0 0.0
        %574 = vmatprep.subr.mxu0 0.0
        %575 = vmatpush2.msra.mxu0 0.0
        %576 = vmatprep.subr.mxu0 0.0
        %577 = vmatpush2.msra.mxu0 0.0
        %578 = vmatprep.subr.mxu0 0.0
        %579 = vmatpush2.msra.mxu0 0.0
        %580 = vmatprep.subr.mxu0 0.0
        %581 = vmatpush2.msra.mxu0 0.0
        %582 = vmatprep.mubr.f32.mxu0 0.0
        %583 = vmatmul.mubr.f32.gmra.mxu0 %v516
        %v584 = vpop.f32.mrf.mxu0
        %v585 = vadd.f32 0.0, %v584
        %v586 = vpop.f32.mrf.mxu0
        %587 = vdwg.mxu0
        %v588 = vrcp.pop %v514
        %v589 = vmul.f32 1.0, %v588
        %v590 = vmul.f32 %v585, %v589
        %591 = vst.msk [vmem:[%s361] sm:$0xff] %vm415, %v396
        %593 = vrot.lane.b32.xlu0 %v590, 32
        %v594 = vpop.permute.xlu0 %593
        %vm596 = vcmask 523520
        %597 = vst.msk [vmem:[%s361] sm:$0xff] %vm596, %v594
        %v598 = vmul.f32 %v396, %v590
        %600 = vrot.lane.b32.xlu0 %v598, 64
        %v601 = vpop.permute.xlu0 %600
        %vm603 = vcmask 785920
        %604 = vst.msk [vmem:[%s361] sm:$0xff] %vm603, %v601
        %p605 = scmp.eq.s32.totalorder %s30, 0
        // Predicated region
        $region45: #{tpu_custom_call.1} parent=43 // pred_check
          %p606 = pneg %p605
        $region46: #{tpu_custom_call.1} parent=43 // pred_check_branch
          %608 = sbr.rel (%p606) target = $region48
        $region47: #{tpu_custom_call.1} parent=43 // pred_region
          %vm609 = vcmask 0
          %610 = vst.msk [vmem:[#allocation3] sm:$0x1] %vm609, -inf
          %611 = vst.msk [vmem:[#allocation4] sm:$0x1] %vm609, 0.0
          %vm612 = vcmask 253952
          %613 = vst.msk [vmem:[#allocation2] sm:$0x1] %vm612, 0.0
        $region48: #{tpu_custom_call.1} parent=43 // pred_fallthru
          _
        %v614 = vrot.slane %v508, 4
        %v615 = vmax.f32 %v508, %v614
        %v616 = vrot.slane %v615, 2
        %v617 = vmax.f32 %v615, %v616
        %v618 = vrot.slane %v617, 1
        %v619 = vmax.f32 %v617, %v618
        %v620 = vld [vmem:[#allocation3] sm:$0x1]
        %v621 = vmax.f32 %v620, %v619
        %v622 = vsub.f32 %v620, %v621
        %v623 = vmul.f32 %v622, 1.442695
        %v624 = vpow.pop %v623
        %v626 = vlaneseq
        %v627 = vshrl.u32 %v626, 7
        %v628 = vsub.s32 0, %v627
        %v629 = vrot.slane %v621, %v628
        %v631 = vsub.f32 %v508, %v629
        %v632 = vmul.f32 %v631, 1.442695
        %v633 = vpow.pop %v632
        %v634 = vld [vmem:[#allocation4] sm:$0x1]
        %v635 = vmul.f32 %v624, %v634
        %vm636 = vcmask 7168
        %v637 = vsel %vm636, %v633, 0.0
        %v638 = vrot.slane %v637, 4
        %v639 = vadd.f32 %v637, %v638
        %v640 = vrot.slane %v639, 2
        %v641 = vadd.f32 %v639, %v640
        %v642 = vrot.slane %v641, 1
        %v643 = vadd.f32 %v641, %v642
        %v644 = vadd.f32 %v635, %v643
        %vm645 = vcmask 0
        %646 = vst.msk [vmem:[#allocation4] sm:$0x1] %vm645, %v644
        %647 = vxpose.xlu0.b32.start [1/16] %v633, 128
        %648 = vxpose.xlu0.b32.cont [2/16] 0.0, 128
        %649 = vxpose.xlu0.b32.cont [3/16] 0.0, 128
        %650 = vxpose.xlu0.b32.cont [4/16] 0.0, 128
        %651 = vxpose.xlu0.b32.cont [5/16] 0.0, 128
        %652 = vxpose.xlu0.b32.cont [6/16] 0.0, 128
        %653 = vxpose.xlu0.b32.cont [7/16] 0.0, 128
        %654 = vxpose.xlu0.b32.cont [8/16] 0.0, 128
        %655 = vxpose.xlu0.b32.cont [9/16] 0.0, 128
        %656 = vxpose.xlu0.b32.cont [10/16] 0.0, 128
        %657 = vxpose.xlu0.b32.cont [11/16] 0.0, 128
        %658 = vxpose.xlu0.b32.cont [12/16] 0.0, 128
        %659 = vxpose.xlu0.b32.cont [13/16] 0.0, 128
        %660 = vxpose.xlu0.b32.cont [14/16] 0.0, 128
        %661 = vxpose.xlu0.b32.cont [15/16] 0.0, 128
        %662 = vxpose.xlu0.b32.end [16/16] 0.0, 128
        %v663 = vpop.trf.xlu0
        %v664 = vpop.trf.xlu0
        %v665 = vpop.trf.xlu0
        %v666 = vpop.trf.xlu0
        %v667 = vpop.trf.xlu0
        %v668 = vpop.trf.xlu0
        %v669 = vpop.trf.xlu0
        %v670 = vpop.trf.xlu0
        %v671 = vpop.trf.xlu0
        %v672 = vpop.trf.xlu0
        %v673 = vpop.trf.xlu0
        %v674 = vpop.trf.xlu0
        %v675 = vpop.trf.xlu0
        %v676 = vpop.trf.xlu0
        %v677 = vpop.trf.xlu0
        %v678 = vpop.trf.xlu0
        %v680 = vsel %vm505, %v663, 0
        %682 = vmatprep.subr.mxu0 0.0
        %683 = vmatpush1.msra.mxu0 0.0
        %684 = vmatprep.subr.mxu0 0.0
        %685 = vmatpush1.msra.mxu0 0.0
        %686 = vmatprep.subr.mxu0 0.0
        %687 = vmatpush1.msra.mxu0 0.0
        %688 = vmatprep.subr.mxu0 0.0
        %689 = vmatpush1.msra.mxu0 0.0
        %690 = vmatprep.subr.mxu0 0.0
        %691 = vmatpush1.msra.mxu0 0.0
        %692 = vmatprep.subr.mxu0 0.0
        %693 = vmatpush1.msra.mxu0 0.0
        %694 = vmatprep.subr.mxu0 0.0
        %695 = vmatpush1.msra.mxu0 0.0
        %696 = vmatprep.subr.mxu0 0.0
        %697 = vmatpush1.msra.mxu0 0.0
        %698 = vmatprep.subr.mxu0 0.0
        %699 = vmatpush1.msra.mxu0 0.0
        %700 = vmatprep.subr.mxu0 0.0
        %701 = vmatpush1.msra.mxu0 0.0
        %702 = vmatprep.subr.mxu0 0.0
        %703 = vmatpush1.msra.mxu0 0.0
        %704 = vmatprep.subr.mxu0 0.0
        %705 = vmatpush1.msra.mxu0 0.0
        %706 = vmatprep.subr.mxu0 0.0
        %707 = vmatpush1.msra.mxu0 0.0
        %708 = vmatprep.subr.mxu0 0.0
        %709 = vmatpush1.msra.mxu0 0.0
        %710 = vmatprep.subr.mxu0 0.0
        %711 = vmatpush1.msra.mxu0 0.0
        %712 = vmatprep.subr.mxu0 0.0
        %713 = vmatpush1.msra.mxu0 %v396
        %714 = vmatprep.subr.mxu0 0.0
        %715 = vmatpush2.msra.mxu0 0.0
        %716 = vmatprep.subr.mxu0 0.0
        %717 = vmatpush2.msra.mxu0 0.0
        %718 = vmatprep.subr.mxu0 0.0
        %719 = vmatpush2.msra.mxu0 0.0
        %720 = vmatprep.subr.mxu0 0.0
        %721 = vmatpush2.msra.mxu0 0.0
        %722 = vmatprep.subr.mxu0 0.0
        %723 = vmatpush2.msra.mxu0 0.0
        %724 = vmatprep.subr.mxu0 0.0
        %725 = vmatpush2.msra.mxu0 0.0
        %726 = vmatprep.subr.mxu0 0.0
        %727 = vmatpush2.msra.mxu0 0.0
        %728 = vmatprep.subr.mxu0 0.0
        %729 = vmatpush2.msra.mxu0 0.0
        %730 = vmatprep.subr.mxu0 0.0
        %731 = vmatpush2.msra.mxu0 0.0
        %732 = vmatprep.subr.mxu0 0.0
        %733 = vmatpush2.msra.mxu0 0.0
        %734 = vmatprep.subr.mxu0 0.0
        %735 = vmatpush2.msra.mxu0 0.0
        %736 = vmatprep.subr.mxu0 0.0
        %737 = vmatpush2.msra.mxu0 0.0
        %738 = vmatprep.subr.mxu0 0.0
        %739 = vmatpush2.msra.mxu0 0.0
        %740 = vmatprep.subr.mxu0 0.0
        %741 = vmatpush2.msra.mxu0 0.0
        %742 = vmatprep.subr.mxu0 0.0
        %743 = vmatpush2.msra.mxu0 0.0
        %744 = vmatprep.subr.mxu0 0.0
        %745 = vmatpush2.msra.mxu0 0.0
        %746 = vmatprep.mubr.f32.mxu0 0.0
        %747 = vmatmul.mubr.f32.gmra.mxu0 %v680
        %v748 = vpop.f32.mrf.mxu0
        %v749 = vadd.f32 0.0, %v748
        %v750 = vpop.f32.mrf.mxu0
        %751 = vdwg.mxu0
        %v752 = vld [vmem:[#allocation2] sm:$0x1]
        %754 = vset.pattern.permute.xlu0 0
        %755 = vperm.xlu0 %754, %v624
        %v756 = vpop.permute.xlu0 %755
        %v758 = vlaneseq
        %v759 = vshrl.u32 %v758, 7
        %v760 = vsub.s32 0, %v759
        %v761 = vrot.slane %v756, %v760
        %v762 = vmul.f32 %v761, %v752
        %v763 = vadd.f32 %v762, %v749
        %vm764 = vcmask 253952
        %765 = vst.msk [vmem:[#allocation2] sm:$0x1] %vm764, %v763
        %766 = vst.msk [vmem:[#allocation3] sm:$0x1] %vm645, %v621
        // Predicated region
        $region49: #{tpu_custom_call.1} parent=43 // pred_check
          %p767 = pneg %p605
        $region50: #{tpu_custom_call.1} parent=43 // pred_check_branch
          %769 = sbr.rel (%p767) target = $region52
        $region51: #{tpu_custom_call.1} parent=43 // pred_region
          %v770 = vld [vmem:[#allocation2] sm:$0x1]
          %v771 = vld [vmem:[#allocation4] sm:$0x1]
          %773 = vset.pattern.permute.xlu0 0
          %774 = vperm.xlu0 %773, %v771
          %v775 = vpop.permute.xlu0 %774
          %v777 = vlaneseq
          %v778 = vshrl.u32 %v777, 7
          %v779 = vsub.s32 0, %v778
          %v780 = vrot.slane %v775, %v779
          %v781 = vrcp.pop %v780
          %v782 = vmul.f32 %v770, %v781
          %783 = vst.msk [vmem:[%s367] sm:$0x1] %vm764, %v782
        $region52: #{tpu_custom_call.1} parent=43 // pred_fallthru
          _
        %s784 = sand.u32 %s204, 1
        %s785 = scalar_lea.sflag [#allocation6], %s784
        %s786 = sand.u32 %s204, 1
        %s787 = smul.addr %s786, 8
        %s788 = scalar_lea.vmem [#allocation5], %s787
        %s789 = sand.u32 %s230, 1
        %s790 = scalar_lea.sflag [#allocation8], %s789
        %s791 = sand.u32 %s230, 1
        %s792 = scalar_lea.vmem [#allocation7], %s791
        // Predicated region
        $region53: #{tpu_custom_call.1} parent=43 // pred_check
          %p793 = pneg %p214
        $region54: #{tpu_custom_call.1} parent=43 // pred_check_branch
          %795 = sbr.rel (%p793) target = $region56
        $region55: #{tpu_custom_call.1} parent=43 // pred_region
          %s797 = ssub.s32 128, 128
          %798 = vsyncadd %s785, %s797
          %s799 = sadd.s32 %s30, %s29
          %s800 = smul.addr %s799, 128
          %s801 = scalar_lea.hbm %s6, %s800
          %s803 = sshll.u32 %s788, 4
          %s804 = int_to_ptr.vmem [resolvable:$true] %s803
          %806 = dma.vmem_to_hbm [thread:$0]  %s804, 128, %s801, %s785
        $region56: #{tpu_custom_call.1} parent=43 // pred_fallthru
          _
        // Predicated region
        $region57: #{tpu_custom_call.1} parent=43 // pred_check
          %p807 = pneg %p240
        $region58: #{tpu_custom_call.1} parent=43 // pred_check_branch
          %809 = sbr.rel (%p807) target = $region60
        $region59: #{tpu_custom_call.1} parent=43 // pred_region
          %s811 = ssub.s32 16, 16
          %812 = vsyncadd %s790, %s811
          %s813 = smul.addr %s29, 16
          %s814 = scalar_lea.hbm %s7, %s813
          %s816 = sshll.u32 %s792, 4
          %s817 = int_to_ptr.vmem [resolvable:$true] %s816
          %819 = dma.vmem_to_hbm [thread:$0]  %s817, 16, %s814, %s790
        $region60: #{tpu_custom_call.1} parent=43 // pred_fallthru
          _
      $region44: #{tpu_custom_call.1} parent=5 // pred_fallthru
        _
      %p820 = scmp.le.s32.totalorder 2, %s20
      // Predicated region
      $region61: #{tpu_custom_call.1} parent=5 // pred_check
        %p821 = pneg %p820
      $region62: #{tpu_custom_call.1} parent=5 // pred_check_branch
        %823 = sbr.rel (%p821) target = $region64
      $region63: #{tpu_custom_call.1} parent=5 // pred_region
        %s824 = ssub.s32 %s20, 2
        // Predicated region
        $region65: #{tpu_custom_call.1} parent=63 // pred_check
          %p825 = pneg %p220
        $region66: #{tpu_custom_call.1} parent=63 // pred_check_branch
          %827 = sbr.rel (%p825) target = $region68
        $region67: #{tpu_custom_call.1} parent=63 // pred_region
          %s828 = sand.u32 %s205, 1
          %s829 = scalar_lea.sflag [#allocation6], %s828
          %s830 = sand.u32 %s205, 1
          %s831 = smul.addr %s830, 8
          %s832 = scalar_lea.vmem [#allocation5], %s831
          %833 = dma.done %s829, 128
        $region68: #{tpu_custom_call.1} parent=63 // pred_fallthru
          _
        // Predicated region
        $region69: #{tpu_custom_call.1} parent=63 // pred_check
          %p834 = pneg %p246
        $region70: #{tpu_custom_call.1} parent=63 // pred_check_branch
          %836 = sbr.rel (%p834) target = $region72
        $region71: #{tpu_custom_call.1} parent=63 // pred_region
          %s837 = sand.u32 %s231, 1
          %s838 = scalar_lea.sflag [#allocation8], %s837
          %s839 = sand.u32 %s231, 1
          %s840 = scalar_lea.vmem [#allocation7], %s839
          %841 = dma.done %s838, 16
        $region72: #{tpu_custom_call.1} parent=63 // pred_fallthru
          _
      $region64: #{tpu_custom_call.1} parent=5 // pred_fallthru
        _
    $region6: #{tpu_custom_call.1} parent=1 // loop_footer
      %s24 = sadd.s32 1, %s20
    $region7: #{tpu_custom_call.1} parent=1 // loop_footer_branch
      %19 = sbr.rel target = $region3
    $region8: #{tpu_custom_call.1} parent=1 // loop_exit
      _
    %842 = vsyncpa [#allocation6], 1
    %s843 = scalar_lea.sflag [#allocation6], 1
    %844 = vsyncpa %s843, 1
    %845 = vsyncpa [#allocation8], 1
    %s846 = scalar_lea.sflag [#allocation8], 1
    %847 = vsyncpa %s846, 1

</llo_original>
